<compile_context>
chip_gen: v5e
topology: v5e:2x2
jax: 0.10.0
libtpu: 0.0.40
codegen_flags: <defaults>
</compile_context>

<pallas_src>
import functools
import math

import jax
import jax.numpy as jnp
from jax import lax
from jax.experimental import pallas as pl
from jax.experimental.pallas import tpu as pltpu


# --------------------------------------------------------------------------
# Import-time probes (run eagerly, outside any trace -> jit-safe wrappers).
# --------------------------------------------------------------------------
def _probe_roll_sign():
    """Pin pltpu.roll's rotation convention against jnp.roll once."""
    def probe(x_ref, o_ref):
        o_ref[...] = pltpu.roll(x_ref[...], 1, axis=0)

    x = jnp.arange(8 * 128, dtype=jnp.float32).reshape(8, 128)
    y = pl.pallas_call(probe, out_shape=jax.ShapeDtypeStruct(x.shape, x.dtype))(x)
    return 1 if bool(jnp.all(y == jnp.roll(x, 1, axis=0))) else -1


def _probe_vmem_whole_array():
    """Check that whole-array memory_space=VMEM in_specs lower on this build."""
    try:
        def k(w_ref, o_ref):
            o_ref[...] = w_ref[...] * 2.0

        w = jnp.ones((8, 128), jnp.float32)
        out = pl.pallas_call(
            k,
            out_shape=jax.ShapeDtypeStruct((8, 128), jnp.float32),
            grid=(1,),
            in_specs=[pl.BlockSpec(memory_space=pltpu.MemorySpace.VMEM)],
            out_specs=pl.BlockSpec((8, 128), lambda i: (0, 0)),
        )(w)
        jax.block_until_ready(out)
        return True
    except Exception:
        return False


_ROLL_SIGN = _probe_roll_sign()
_VMEM_WHOLE_ARRAY_OK = _probe_vmem_whole_array()


# --------------------------------------------------------------------------
# Kernel: one FFT block over a (tb, S, D) batch chunk.
# --------------------------------------------------------------------------
def _fft_block_kernel(
    x_ref, npcol_ref, amask_ref,
    wqkv_ref, bqkv_ref, wo_ref, bo_ref,
    w1_ref, b1_ref, w2_ref, b2_ref, g_ref, beta_ref,
    out_ref,
    *, n_head, conv_ks, conv_pads, roll_sign,
):
    TB, S, D = x_ref.shape
    N = TB * S
    dh = D // n_head
    K0, K1 = conv_ks
    P0, P1 = conv_pads

    x_bf = x_ref[...].reshape(N, D).astype(jnp.bfloat16)   # merged (batch*seq, D) slab
    np_col = npcol_ref[...]                                 # (N, 1) f32 non-pad mask
    amask = amask_ref[...]                                  # (TB, 1, S) additive key mask

    # ---- fused QKV projection: [Q*scale | K | V] layout, one MXU dispatch ----
    qkv = jnp.dot(x_bf, wqkv_ref[...], preferred_element_type=jnp.float32) + bqkv_ref[...]

    # ---- multi-head self-attention: TB-batched einsums per head ----
    acc = jnp.zeros((N, D), jnp.float32)
    for h in range(n_head):                                 # static unroll (n_head small)
        lo = h * dh
        qh = qkv[:, lo:lo + dh].astype(jnp.bfloat16).reshape(TB, S, dh)
        kh = qkv[:, D + lo:D + lo + dh].astype(jnp.bfloat16).reshape(TB, S, dh)
        vh = qkv[:, 2 * D + lo:2 * D + lo + dh].astype(jnp.bfloat16).reshape(TB, S, dh)
        s = jnp.einsum("bqd,bkd->bqk", qh, kh,
                       preferred_element_type=jnp.float32) + amask
        s = s - jnp.max(s, axis=-1, keepdims=True)
        p = jnp.exp(s)
        p = p * pl.reciprocal(jnp.sum(p, axis=-1, keepdims=True), approx=True)
        ctx = jnp.einsum("bqk,bkd->bqd", p.astype(jnp.bfloat16), vh,
                         preferred_element_type=jnp.float32)
        # per-head output-projection accumulate: no head concat, no batch concat
        acc = acc + jnp.dot(ctx.reshape(N, dh).astype(jnp.bfloat16), wo_ref[h],
                            preferred_element_type=jnp.float32)
    attn = (acc + bo_ref[...]) * np_col                     # (N, D) f32

    # ---- position-wise FFN: Conv1d -> ReLU -> Conv1d, each as ONE matmul ----
    local = lax.broadcasted_iota(jnp.int32, (N, 1), 0) % S  # hoisted within-seq position

    def conv_as_matmul(inp_f32, w_ref, b_ref, K, P):
        taps = []
        for tap in range(K):                                # static unroll
            shift = P - tap                                 # out[s] += in[s - shift] @ w[tap]
            src = inp_f32
            if shift % N != 0:
                src = pltpu.roll(src, (roll_sign * shift) % N, axis=0)
            src = src.astype(jnp.bfloat16)
            # zero rows whose source falls outside [0, S) of the same sequence
            if shift > 0:
                m = jnp.where(local >= shift, 1.0, 0.0).astype(jnp.bfloat16)
                src = src * m
            elif shift < 0:
                m = jnp.where(local < S + shift, 1.0, 0.0).astype(jnp.bfloat16)
                src = src * m
            taps.append(src)
        slab = taps[0] if K == 1 else jnp.concatenate(taps, axis=-1)  # (N, K*D_in) bf16
        return jnp.dot(slab, w_ref[...], preferred_element_type=jnp.float32) + b_ref[...]

    h1 = jnp.maximum(conv_as_matmul(attn, w1_ref, b1_ref, K0, P0), 0.0)   # (N, d_hid)
    h2 = conv_as_matmul(h1, w2_ref, b2_ref, K1, P1)                       # (N, D)

    # ---- residual + LayerNorm (eps = 1e-5) + non_pad_mask ----
    hsum = h2 + attn
    mean = jnp.mean(hsum, axis=-1, keepdims=True)
    cent = hsum - mean
    var = jnp.mean(cent * cent, axis=-1, keepdims=True)
    o = cent * lax.rsqrt(var + 1e-5) * g_ref[...] + beta_ref[...]
    o = o * np_col
    out_ref[...] = o.reshape(TB, S, D).astype(out_ref.dtype)


# --------------------------------------------------------------------------
# Wrapper
# --------------------------------------------------------------------------
_WEIGHT_NAMES = ("wqkv", "bqkv", "wo", "bo", "w1f", "b1", "w2f", "b2", "ln_g", "ln_b")


def _vmem_limit_bytes():
    """~15% headroom under the physical per-core VMEM of this chip
    (v5e/v6e: 128 MiB -> ~108 MiB, v7x: 64 MiB -> ~54 MiB)."""
    try:
        return int(pltpu.get_tpu_info().vmem_capacity_bytes * 0.85)
    except Exception:
        return 48 * 1024 * 1024   # conservative fallback, safe on all generations


def _pick_batch_tile(B, S, D, d_hid, K0, vmem_limit):
    """Largest divisor of B such that (a) >= 2 grid steps remain when B > 1
    (keeps both v7x TensorCores fed under dimension_semantics=('parallel',)),
    (b) the merged slab stays <= ~1024 rows, and (c) a rough estimate of the
    live per-step intermediates fits the VMEM budget with headroom.  When B==1
    and S is not a multiple of 8 the slab is sublane-misaligned (correct, just
    slower)."""
    cap = max(1, B // 2)
    # rough bytes per merged row: f32 qkv/attn/ffn intermediates + bf16 tap slab
    per_row = 4 * (3 * D + 4 * D + d_hid) + 2 * (K0 * D + D)
    best = 1
    for tb in range(1, cap + 1):
        if B % tb:
            continue
        rows = tb * S
        if rows > 1024 or 3 * rows * per_row > vmem_limit:
            break
        if rows % 8 == 0 or (best * S) % 8 != 0:
            best = tb
    return best


def fft_block(x, np_col2d, add_mask, params, *, n_head, conv_ks, conv_pads, tb, vmem_limit):
    """One FFTBlock over (B, S, D) activations; grid over batch chunks of `tb`."""
    B, S, D = x.shape
    dh = D // n_head
    K0, K1 = conv_ks
    d_hid = params["w1f"].shape[1]
    weights = [params[n] for n in _WEIGHT_NAMES]

    kernel = functools.partial(_fft_block_kernel, n_head=n_head, conv_ks=conv_ks,
                               conv_pads=conv_pads, roll_sign=_ROLL_SIGN)

    flops = int(2 * B * S * D * (3 * D)                       # fused QKV projection
                + 4 * B * n_head * S * S * dh                 # scores + P@V
                + 2 * B * S * D * D                           # output projection
                + 2 * B * S * (K0 * D * d_hid + K1 * d_hid * D))  # conv FFN
    # Constant-index weights are DMA'd once per pallas_call, not per grid step.
    bytes_accessed = int(2 * x.size * x.dtype.itemsize
                         + np_col2d.size * 4 + add_mask.size * 4
                         + sum(int(w.size) * w.dtype.itemsize for w in weights))
    cost = pl.CostEstimate(flops=flops, transcendentals=int(B * n_head * S * S),
                           bytes_accessed=bytes_accessed)

    if _VMEM_WHOLE_ARRAY_OK:
        # whole-array, single-buffered VMEM residency for the constant weights
        w_specs = [pl.BlockSpec(memory_space=pltpu.MemorySpace.VMEM) for _ in weights]
    else:
        # fallback: full-shape blocks with a constant index map
        w_specs = [pl.BlockSpec(w.shape, lambda b, _nd=w.ndim: (0,) * _nd) for w in weights]

    in_specs = [
        pl.BlockSpec((tb, S, D), lambda b: (b, 0, 0)),        # activations
        pl.BlockSpec((tb * S, 1), lambda b: (b, 0)),          # merged-slab non-pad column
        pl.BlockSpec((tb, 1, S), lambda b: (b, 0, 0)),        # additive key-pad mask
    ] + w_specs

    return pl.pallas_call(
        kernel,
        out_shape=jax.ShapeDtypeStruct((B, S, D), x.dtype),
        grid=(B // tb,),
        in_specs=in_specs,
        out_specs=pl.BlockSpec((tb, S, D), lambda b: (b, 0, 0)),
        compiler_params=pltpu.CompilerParams(
            dimension_semantics=("parallel",),                # batch chunks independent
            vmem_limit_bytes=vmem_limit),
        cost_estimate=cost,
    )(x, np_col2d, add_mask, *weights)


def encoder_forward(src_seq, src_pos, enc_params, *, PAD, n_head, conv_ks, conv_pads):
    """Mirrors Encoder.forward: returns (enc_output, non_pad_mask)."""
    word_emb = enc_params["word_emb"]
    pos_emb = enc_params["pos_emb"]
    B, S = src_seq.shape
    D = word_emb.shape[1]

    non_pad = (src_seq != PAD).astype(jnp.float32)                       # (B, S)
    np_col2d = non_pad.reshape(B * S, 1)                                 # merged-slab column
    add_mask = jnp.where(src_seq == PAD, -1e30, 0.0).astype(jnp.float32)[:, None, :]

    # Embedding gathers stay in plain JAX (glue); hot path is in the kernel.
    x = jnp.take(word_emb, src_seq, axis=0) + jnp.take(pos_emb, src_pos, axis=0)
    x = x.astype(jnp.bfloat16)                                           # bf16 inter-layer

    vmem_limit = _vmem_limit_bytes()
    d_hid = enc_params["layers"][0]["w1f"].shape[1]
    tb = _pick_batch_tile(B, S, D, d_hid, conv_ks[0], vmem_limit)

    for layer_params in enc_params["layers"]:
        x = fft_block(x, np_col2d, add_mask, layer_params, n_head=n_head,
                      conv_ks=conv_ks, conv_pads=conv_pads, tb=tb, vmem_limit=vmem_limit)
    return x.astype(jnp.float32), non_pad[:, :, None]


# --------------------------------------------------------------------------
# Parameters (raw "PyTorch-layout" weights -> kernel layout)
# --------------------------------------------------------------------------
def _prepare_layer(raw, n_head):
    D = raw["wq"].shape[0]
    dh = D // n_head
    scale = 1.0 / math.sqrt(dh)
    K0 = raw["w1"].shape[0]
    K1 = raw["w2"].shape[0]
    d_hid = raw["w1"].shape[2]
    # [Q*scale | K | V] layout: region offsets 0, D, 2D; head h occupies
    # columns h*dh:(h+1)*dh of its region.  Softmax scale pre-folded into Q.
    wqkv = jnp.concatenate([raw["wq"] * scale, raw["wk"], raw["wv"]], axis=1)
    bqkv = jnp.concatenate([raw["bq"] * scale, raw["bk"], raw["bv"]], axis=1)
    return dict(
        wqkv=wqkv.astype(jnp.bfloat16),                                  # (D, 3D)
        bqkv=bqkv,                                                       # (1, 3D) f32
        wo=raw["wo"].reshape(n_head, dh, D).astype(jnp.bfloat16),        # per-head out proj
        bo=raw["bo"],
        w1f=raw["w1"].reshape(K0 * D, d_hid).astype(jnp.bfloat16),       # tap-major rows
        b1=raw["b1"],
        w2f=raw["w2"].reshape(K1 * d_hid, D).astype(jnp.bfloat16),
        b2=raw["b2"],
        ln_g=raw["ln_g"], ln_b=raw["ln_b"],
    )


def init_params(key, *, vocab, n_position, D, d_hid, n_layers, K, PAD, n_head):
    keys = jax.random.split(key, 2 + n_layers)
    word_emb = jax.random.normal(keys[0], (vocab, D), jnp.float32) * 0.1
    word_emb = word_emb.at[PAD].set(0.0)
    pos_emb = jax.random.normal(keys[1], (n_position, D), jnp.float32) * 0.1
    pos_emb = pos_emb.at[PAD].set(0.0)
    layers = []
    for i in range(n_layers):
        ks = jax.random.split(keys[2 + i], 6)
        raw = dict(
            wq=jax.random.normal(ks[0], (D, D), jnp.float32) * 0.05,
            bq=jnp.zeros((1, D), jnp.float32),
            wk=jax.random.normal(ks[1], (D, D), jnp.float32) * 0.05,
            bk=jnp.zeros((1, D), jnp.float32),
            wv=jax.random.normal(ks[2], (D, D), jnp.float32) * 0.05,
            bv=jnp.zeros((1, D), jnp.float32),
            wo=jax.random.normal(ks[3], (D, D), jnp.float32) * 0.05,
            bo=jnp.zeros((1, D), jnp.float32),
            # Conv1d weights stored tap-major, pre-transposed: (K, C_in, C_out)
            w1=jax.random.normal(ks[4], (K[0], D, d_hid), jnp.float32) * 0.05,
            b1=jnp.zeros((1, d_hid), jnp.float32),
            w2=jax.random.normal(ks[5], (K[1], d_hid, D), jnp.float32) * 0.05,
            b2=jnp.zeros((1, D), jnp.float32),
            ln_g=jnp.ones((1, D), jnp.float32),
            ln_b=jnp.zeros((1, D), jnp.float32),
        )
        layers.append(_prepare_layer(raw, n_head))
    return dict(word_emb=word_emb, pos_emb=pos_emb, layers=layers)


# --------------------------------------------------------------------------
# Pure-JAX f32 reference (same prepared params) for a numerical parity check.
# --------------------------------------------------------------------------
def _reference_forward(src_seq, src_pos, enc_params, *, PAD, n_head, conv_ks, conv_pads):
    word_emb, pos_emb = enc_params["word_emb"], enc_params["pos_emb"]
    non_pad = (src_seq != PAD).astype(jnp.float32)[:, :, None]
    add_mask = jnp.where(src_seq == PAD, -1e30, 0.0).astype(jnp.float32)[:, None, :]
    x = jnp.take(word_emb, src_seq, axis=0) + jnp.take(pos_emb, src_pos, axis=0)
    B, S, D = x.shape
    dh = D // n_head
    K0, K1 = conv_ks
    P0, P1 = conv_pads
    for p in enc_params["layers"]:
        qkv = jnp.einsum("bsd,de->bse", x, p["wqkv"].astype(jnp.float32)) + p["bqkv"]
        q, k, v = qkv[..., :D], qkv[..., D:2 * D], qkv[..., 2 * D:]
        wo = p["wo"].astype(jnp.float32)
        attn = jnp.zeros((B, S, D), jnp.float32)
        for h in range(n_head):
            sl = slice(h * dh, (h + 1) * dh)
            s = jnp.einsum("bqd,bkd->bqk", q[..., sl], k[..., sl]) + add_mask
            pr = jax.nn.softmax(s, axis=-1)
            attn = attn + jnp.einsum("bqd,de->bqe",
                                     jnp.einsum("bqk,bkd->bqd", pr, v[..., sl]), wo[h])
        attn = (attn + p["bo"]) * non_pad

        w1 = p["w1f"].astype(jnp.float32).reshape(K0, D, -1)
        w2 = p["w2f"].astype(jnp.float32).reshape(K1, -1, D)

        def conv(inp, w, K, P):
            pad = jnp.pad(inp, ((0, 0), (P, P), (0, 0)))
            return sum(jnp.einsum("bsd,de->bse", pad[:, t:t + S, :], w[t])
                       for t in range(K))

        y = jax.nn.relu(conv(attn, w1, K0, P0) + p["b1"])
        z = conv(y, w2, K1, P1) + p["b2"]
        hs = z + attn
        mu = hs.mean(-1, keepdims=True)
        var = ((hs - mu) ** 2).mean(-1, keepdims=True)
        x = ((hs - mu) / jnp.sqrt(var + 1e-5) * p["ln_g"] + p["ln_b"]) * non_pad
    return x


if __name__ == "__main__":
    # Small config consistent with the module's constructor.
    B, S = 2, 16
    max_seq_len = 16
    vocab_size = 20
    encoder_dim = 32
    encoder_conv1d_filter_size = 64
    encoder_head = 2
    encoder_n_layer = 2
    PAD = 0
    fft_conv1d_kernel = (9, 1)
    fft_conv1d_padding = (4, 0)

    key = jax.random.PRNGKey(0)
    k_seq, k_params = jax.random.split(key)

    src_seq = jax.random.randint(k_seq, (B, S), 1, vocab_size, dtype=jnp.int32)
    src_seq = src_seq.at[1, 12:].set(PAD)               # give example #1 some padding
    positions = jnp.arange(1, S + 1, dtype=jnp.int32)[None, :]
    src_pos = jnp.where(src_seq != PAD, positions, PAD)

    params = init_params(
        k_params, vocab=vocab_size, n_position=max_seq_len + 1, D=encoder_dim,
        d_hid=encoder_conv1d_filter_size, n_layers=encoder_n_layer,
        K=fft_conv1d_kernel, PAD=PAD, n_head=encoder_head)

    enc_out, non_pad_mask = encoder_forward(
        src_seq, src_pos, params, PAD=PAD, n_head=encoder_head,
        conv_ks=fft_conv1d_kernel, conv_pads=fft_conv1d_padding)
    jax.block_until_ready(enc_out)

    ref_out = _reference_forward(
        src_seq, src_pos, params, PAD=PAD, n_head=encoder_head,
        conv_ks=fft_conv1d_kernel, conv_pads=fft_conv1d_padding)

    assert enc_out.shape == (B, S, encoder_dim)
    assert non_pad_mask.shape == (B, S, 1)
    assert bool(jnp.all(jnp.isfinite(enc_out)))
    scale = float(jnp.max(jnp.abs(ref_out)))
    err = float(jnp.max(jnp.abs(enc_out - ref_out)))
    # bf16 MXU operands + bf16 inter-layer activations vs an f32 reference:
    # numerical noise stays at the few-percent level, real layout/mask/shift
    # bugs produce O(1) errors, so a mixed abs/rel bound separates them cleanly.
    assert err < 0.05 * scale + 0.05, (
        f"parity vs pure-JAX reference failed: max|diff|={err} (ref scale={scale})")
    print("KERNEL_OK")
</pallas_src>

<mosaic_0001>
module attributes {stable_mosaic.version = 11 : i64} {
  func.func @probe(%arg0: memref<8x128xf32, #tpu.memory_space<vmem>>, %arg1: memref<8x128xf32, #tpu.memory_space<vmem>>) attributes {dimension_semantics = [], scalar_prefetch = 0 : i64, scratch_operands = 0 : i64, tpu.core_type = #tpu.core_type<tc>} {
    %c0 = arith.constant 0 : index
    %c0_0 = arith.constant 0 : index
    %0 = vector.load %arg0[%c0, %c0_0] : memref<8x128xf32, #tpu.memory_space<vmem>>, vector<8x128xf32>
    %c1_i32 = arith.constant 1 : i32
    %1 = tpu.dynamic_rotate %0 by %c1_i32 dim 0 : vector<8x128xf32>, i32 -> vector<8x128xf32>
    %c0_1 = arith.constant 0 : index
    %c0_2 = arith.constant 0 : index
    %2 = vector.load %arg1[%c0_1, %c0_2] : memref<8x128xf32, #tpu.memory_space<vmem>>, vector<8x128xf32>
    tpu.vector_store %arg1[%c0_1, %c0_2], %1 {strides = array<i32>} : memref<8x128xf32, #tpu.memory_space<vmem>>, vector<8x128xf32>,
    return
  }
}

</mosaic_0001>

<llo_original>
// kernel: tpu_custom_call.1
$region0: #{tpu_custom_call.1}
  #allocation0 [shape = 'u32[]', space=smem, size = 0x4, offset = 0x4, fixed_abs, tag = 'smem constant byte address 0x4 - core index']
  #allocation1 [shape = 'u32[72,128]{1,0:T(1,128)}', space=vmem, size = 0x9000, scoped, tag = 'internal scratch']
  %s0 = inlined_call_operand.hbm [shape: f32[8,128], index: 0, kind: input, shape index: {}]
  %s1 = inlined_call_operand.hbm [shape: f32[8,128], index: 1, kind: output, shape index: {}]
  %s2 = sld [smem:[#allocation0]]
  $region18: #{tpu_custom_call.1} parent=0
    _
  %s4 = ssub.s32 1, %s2
  %s5 = scalar_select 0, %s4, %s2
  $region1: #{tpu_custom_call.1} parent=0
    #allocation2 [shape = 'u8[4096]{0}', space=vmem, size = 0x1000, scoped, tag = 'input window, operand 0, single buffered']
    #allocation3 [shape = 's32[1]{0}', space=sflag, size = 0x4, scoped, tag = 'scoped memory for tpu_custom_call.1']
    #allocation4 [shape = 's32[1]{0}', space=sflag, size = 0x4, scoped, tag = 'scoped memory for tpu_custom_call.1']
    #allocation5 [shape = 'u8[4096]{0}', space=vmem, size = 0x1000, scoped, tag = 'output window, operand 0, single buffered']
    %6 = vsyncpa [#allocation3], 0
    %7 = vsyncpa [#allocation4], 0
    // Predicated region
    $region2: #{tpu_custom_call.1} parent=1 // pred_check
      _
    $region3: #{tpu_custom_call.1} parent=1 // pred_check_branch
      %9 = sbr.rel (0) target = $region5
    $region4: #{tpu_custom_call.1} parent=1 // pred_region
      %11 = vsyncadd [#allocation3], 0
      %s13 = sshll.u32 %s0, 4
      %s14 = int_to_ptr.hbm [resolvable:$true] %s13
      %s15 = sshll.u32 [#allocation2], 4
      %s16 = int_to_ptr.vmem [resolvable:$true] %s15
      %18 = dma.hbm_to_vmem [thread:$0]  %s14, 128, %s16, [#allocation3]
    $region5: #{tpu_custom_call.1} parent=1 // pred_fallthru
      _
    // Predicated region
    $region6: #{tpu_custom_call.1} parent=1 // pred_check
      _
    $region7: #{tpu_custom_call.1} parent=1 // pred_check_branch
      %20 = sbr.rel (0) target = $region9
    $region8: #{tpu_custom_call.1} parent=1 // pred_region
      %22 = dma.done [#allocation3], 128
    $region9: #{tpu_custom_call.1} parent=1 // pred_fallthru
      _
    %v23 = vld [vmem:[#allocation2] sm:$0xff]
    %v24 = vrot.slane %v23, 7
    %25 = vst [vmem:[#allocation5] sm:$0xff] %v24
    // Predicated region
    $region10: #{tpu_custom_call.1} parent=1 // pred_check
      _
    $region11: #{tpu_custom_call.1} parent=1 // pred_check_branch
      %27 = sbr.rel (0) target = $region13
    $region12: #{tpu_custom_call.1} parent=1 // pred_region
      %29 = vsyncadd [#allocation4], 0
      %s31 = sshll.u32 [#allocation5], 4
      %s32 = int_to_ptr.vmem [resolvable:$true] %s31
      %s33 = sshll.u32 %s1, 4
      %s34 = int_to_ptr.hbm [resolvable:$true] %s33
      %36 = dma.vmem_to_hbm [thread:$0]  %s32, 128, %s34, [#allocation4]
    $region13: #{tpu_custom_call.1} parent=1 // pred_fallthru
      _
    // Predicated region
    $region14: #{tpu_custom_call.1} parent=1 // pred_check
      _
    $region15: #{tpu_custom_call.1} parent=1 // pred_check_branch
      %38 = sbr.rel (0) target = $region17
    $region16: #{tpu_custom_call.1} parent=1 // pred_region
      %40 = dma.done [#allocation4], 128
    $region17: #{tpu_custom_call.1} parent=1 // pred_fallthru
      _
    %41 = vsyncpa [#allocation3], 1
    %42 = vsyncpa [#allocation4], 1

</llo_original>
